<compile_context>
chip_gen: v7x
topology: tpu7x:2x2x1
jax: 0.10.0
libtpu: 0.0.40
codegen_flags: <defaults>
</compile_context>

<pallas_src>
import functools

import jax
import jax.numpy as jnp
import numpy as np
from jax import lax
from jax.experimental import pallas as pl
from jax.experimental.pallas import tpu as pltpu

# Finite "minus infinity": masked entries underflow in exp and never create
# NaN/Inf arithmetic (NaN * 0 == NaN would otherwise poison the tile sum).
_NEG_SAFE = -1e9


def _angular_loss_kernel(x_ref, side_ref, out_ref, m_sc, l_sc, *,
                         scale, n_rows, n_cols):
    """One (row tile, class tile) step of the angular-margin NLL.

    x_ref:    (TN, TC) cosine logits in their native dtype (f32/bf16).
    side_ref: (TN, 8)  f32 packed per-row side inputs:
                col 0 = margin-adjusted target logit (already * scale)
                col 1 = per-row weight (1/N for real rows, 0 for padding)
                col 2 = target class id as float (exact below 2**24 classes)
    out_ref:  (1, 1)   f32 SMEM partial sum of w * logp[target] per row tile.
    m_sc/l_sc:(TN, 1)  f32 VMEM running max / running sum-exp (online LSE).
    """
    i = pl.program_id(0)
    j = pl.program_id(1)
    tn, tc = x_ref.shape

    @pl.when(j == 0)
    def _init():
        m_sc[...] = jnp.full(m_sc.shape, _NEG_SAFE, jnp.float32)
        l_sc[...] = jnp.zeros(l_sc.shape, jnp.float32)

    side = side_ref[...]                                    # (TN, 8)
    new_zy = side[:, 0:1]                                   # (TN, 1)
    tgt = side[:, 2:3].astype(jnp.int32)                    # (TN, 1)

    zy = x_ref[...].astype(jnp.float32) * scale             # (TN, TC)
    col = j * tc + lax.broadcasted_iota(jnp.int32, (tn, tc), 1)
    one_hot = col == tgt                                    # target-column select

    # Mask out-of-range rows/cols only when the tiling is ragged (static check),
    # so garbage from partial edge blocks can never reach exp/max.
    mask = None
    if n_rows % tn != 0:
        row = i * tn + lax.broadcasted_iota(jnp.int32, (tn, tc), 0)
        mask = row < n_rows
    if n_cols % tc != 0:
        cvalid = col < n_cols
        mask = cvalid if mask is None else (mask & cvalid)
    base = zy if mask is None else jnp.where(mask, zy, _NEG_SAFE)

    # Output logits: target column replaced by the margin-adjusted logit.
    out = jnp.where(one_hot, new_zy, base)                  # (TN, TC)

    # Online log-sum-exp across class tiles.
    m_prev = m_sc[...]
    m_new = jnp.maximum(m_prev, jnp.max(out, axis=1, keepdims=True))
    l_sc[...] = (jnp.exp(m_prev - m_new) * l_sc[...]
                 + jnp.sum(jnp.exp(out - m_new), axis=1, keepdims=True))
    m_sc[...] = m_new

    @pl.when(j == pl.num_programs(1) - 1)
    def _finalize():
        w = side[:, 1:2]
        # log-prob at the target column is simply new_zy - m - log(l).
        tlogp = new_zy - m_sc[...] - jnp.log(l_sc[...])
        out_ref[0, 0] = jnp.sum(w * tlogp)


def _round_up(v, m):
    return -(-v // m) * m


def _pick_tiles(n, c, dtype_bytes, quantum):
    """Per-generation VMEM-aware tile selection (v5e/v6e: 128 MiB, v7x: 64 MiB)."""
    try:
        info = pltpu.get_tpu_info()
        vmem_cap = int(getattr(info, "vmem_capacity_bytes", 64 << 20))
    except Exception:            # no info available -> assume smallest (v7x) VMEM
        vmem_cap = 64 << 20
    usable = max(32 << 20, (vmem_cap * 3) // 4)     # ~96 MiB v5e/v6e, ~48 MiB v7x
    block_budget = min(12 << 20, usable // 6)       # per x block (double-buffered)

    n_q = _round_up(max(n, 1), quantum)
    c_lane = _round_up(max(c, 1), 128)              # lane-padded width in HBM/VMEM
    row_bytes = c_lane * dtype_bytes

    if row_bytes * quantum <= block_budget:
        # Class axis fits untiled; grow the row tile to fill the VMEM budget
        # (big blocks amortize the ~0.35us per-grid-step overhead).
        tile_c = c
        per_row = 2 * row_bytes + 2048   # x dbl-buf + packed side dbl-buf + m/l scratch
        tile_n = min(block_budget // row_bytes,
                     (usable - (12 << 20)) // per_row,
                     8192)
        tile_n = max(quantum, (tile_n // quantum) * quantum)
        tile_n = min(tile_n, n_q)
        if n_q // tile_n <= 1 and n_q >= 2 * quantum:
            # Keep >= 2 row tiles so both v7x TensorCores get balanced work.
            tile_n = _round_up(-(-n // 2), quantum)
    else:
        # Huge class counts: tile the class axis, reduce with an online LSE.
        tile_n = min(n_q, 256)
        tile_c = max(128, ((block_budget // (tile_n * dtype_bytes)) // 128) * 128)
        tile_c = min(tile_c, c_lane)
    return tile_n, tile_c, usable


def angular_loss(x, target, *, margin_a=1.0, margin_m=0.0, margin_b=0.0,
                 scale=64.0, gamma=0.0, block_n=None, block_c=None):
    """Equivalent of AngularLoss.forward(input, target). Returns the scalar loss."""
    del gamma  # unused in the reference forward pass
    n, c = x.shape
    itemsize = jnp.dtype(x.dtype).itemsize
    if itemsize == 2:
        quantum = 16                          # bf16/f16 rows pack 2-per-sublane
    elif itemsize == 4:
        quantum = 8
    else:
        x = x.astype(jnp.float32)             # unusual dtypes: fall back to f32
        itemsize, quantum = 4, 8
    target = target.astype(jnp.int32)

    # ---- O(N) plain-JAX glue: per-row angular-margin transform --------------
    # TODO(synk): acos has no Mosaic/EUP lowering, so cos(a*acos(x)+m)-b stays
    # outside the kernel.  clip guards acos against values eps outside [-1, 1].
    cos_value = jnp.clip(x[jnp.arange(n), target].astype(jnp.float32), -1.0, 1.0)
    theta = jnp.arccos(cos_value) * margin_a + margin_m
    new_zy = (jnp.cos(theta) - margin_b) * float(scale)                 # (N,)

    # ---- tile selection (x goes to the kernel as-is: no padded copy) --------
    tile_n, tile_c, vmem_limit = _pick_tiles(n, c, itemsize, quantum)
    if block_n is not None:                                  # test/tuning override
        tile_n = max(quantum, _round_up(int(block_n), quantum))
    if block_c is not None:
        bc = int(block_c)
        tile_c = bc if bc >= c else max(128, _round_up(bc, 128))
    tile_n = min(tile_n, _round_up(n, quantum))
    num_r = -(-n // tile_n)
    if tile_c >= c:
        c_block, num_c = c, 1
    else:
        c_block, num_c = tile_c, -(-c // tile_c)

    # ---- packed per-row side inputs: one small (rows, 8) array -> one DMA ---
    rows = num_r * tile_n
    side = jnp.zeros((rows, 8), jnp.float32)
    side = side.at[:n, 0].set(new_zy.astype(jnp.float32))
    side = side.at[:n, 1].set(jnp.full((n,), 1.0 / n, jnp.float32))
    side = side.at[:n, 2].set(target.astype(jnp.float32))    # exact for C < 2**24

    kernel = functools.partial(_angular_loss_kernel, scale=float(scale),
                               n_rows=n, n_cols=c)

    partials = pl.pallas_call(
        kernel,
        out_shape=jax.ShapeDtypeStruct((num_r, 1), jnp.float32),
        grid=(num_r, num_c),
        in_specs=[
            pl.BlockSpec((tile_n, c_block), lambda i, j: (i, j)),   # x (native dtype)
            pl.BlockSpec((tile_n, 8), lambda i, j: (i, 0)),         # packed side inputs
        ],
        out_specs=pl.BlockSpec((1, 1), lambda i, j: (i, 0),
                               memory_space=pltpu.MemorySpace.SMEM),
        scratch_shapes=[pltpu.VMEM((tile_n, 1), jnp.float32),       # running max
                        pltpu.VMEM((tile_n, 1), jnp.float32)],      # running sum-exp
        compiler_params=pltpu.CompilerParams(
            dimension_semantics=("parallel", "arbitrary"),
            vmem_limit_bytes=int(vmem_limit)),
    )(x, side)

    return -jnp.sum(partials)


def angular_loss_ref(x, target, *, margin_a=1.0, margin_m=0.0, margin_b=0.0,
                     scale=64.0):
    """Pure-JAX reference mirroring the PyTorch forward."""
    x = x.astype(jnp.float32)
    n, c = x.shape
    zy = x * scale
    one_hot = jax.nn.one_hot(target, c, dtype=x.dtype)
    sel = jnp.sum(zy * one_hot, axis=1)
    cos_value = sel / scale
    theta = jnp.arccos(cos_value) * margin_a + margin_m
    cos_t = jnp.cos(theta) - margin_b
    new_zy = cos_t * scale
    out = zy + one_hot * (new_zy - sel)[:, None]
    logp = jax.nn.log_softmax(out, axis=1)
    return -jnp.mean(logp[jnp.arange(n), target])


if __name__ == "__main__":
    key = jax.random.PRNGKey(0)
    ok = True

    cases = [
        # (N, C, dtype, forced block_n, forced block_c)
        (8, 16, jnp.float32, None, None),        # aligned, single tile
        (10, 37, jnp.float32, None, None),       # ragged rows + non-128 classes
        (256, 512, jnp.float32, None, None),     # aligned, multi row-tile fast path
        (32, 256, jnp.bfloat16, None, None),     # native bf16 input (no upcast DMA)
        (12, 300, jnp.float32, 8, 128),          # force class tiling (online LSE path)
    ]
    for (N, C, dt, bn, bc) in cases:
        kx, kt, key = jax.random.split(key, 3)
        # inputs are cosine similarities in (-1, 1)
        x = jnp.tanh(jax.random.normal(kx, (N, C), dtype=jnp.float32)).astype(dt)
        target = jax.random.randint(kt, (N,), 0, C, dtype=jnp.int32)

        for kwargs in (
            dict(margin_a=1.0, margin_m=0.0, margin_b=0.0, scale=64.0),  # defaults
            dict(margin_a=1.0, margin_m=0.2, margin_b=0.1, scale=32.0),  # non-trivial
        ):
            got = jax.block_until_ready(
                angular_loss(x, target, block_n=bn, block_c=bc, **kwargs))
            want = jax.block_until_ready(angular_loss_ref(x, target, **kwargs))
            if not np.allclose(np.asarray(got), np.asarray(want),
                               rtol=5e-5, atol=5e-5):
                ok = False
                print("MISMATCH", (N, C, str(dt)), kwargs, float(got), float(want))

    if ok:
        print("KERNEL_OK")
</pallas_src>

<mosaic_0001>
module attributes {stable_mosaic.version = 11 : i64} {
  func.func @_angular_loss_kernel(%arg0: i32, %arg1: i32, %arg2: memref<8x16xf32, #tpu.memory_space<vmem>>, %arg3: memref<8x8xf32, #tpu.memory_space<vmem>>, %arg4: memref<1x1xf32, #tpu.memory_space<smem>>, %arg5: memref<8x1xf32, #tpu.memory_space<vmem>>, %arg6: memref<8x1xf32, #tpu.memory_space<vmem>>) attributes {dimension_semantics = [#tpu.dimension_semantics<parallel>, #tpu.dimension_semantics<arbitrary>], iteration_bounds = array<i64: 1, 1>, scalar_prefetch = 0 : i64, scratch_operands = 2 : i64, tpu.core_type = #tpu.core_type<tc>, window_params = [{transform_indices = @transform_0, window_bounds = array<i64: 8, 16>}, {transform_indices = @transform_1, window_bounds = array<i64: 8, 8>}, {transform_indices = @transform_2, window_bounds = array<i64: 1, 1>}]} {
    %c0_i32 = arith.constant 0 : i32
    %0 = arith.cmpi eq, %arg1, %c0_i32 : i32
    %1 = arith.extui %0 : i1 to i32
    %c0_i32_0 = arith.constant 0 : i32
    %2 = arith.cmpi ne, %1, %c0_i32_0 : i32
    scf.if %2 {
      %cst_16 = arith.constant -1.000000e+09 : f32
      %38 = vector.broadcast %cst_16 : f32 to vector<8x1xf32>
      %c0_17 = arith.constant 0 : index
      %c0_18 = arith.constant 0 : index
      %39 = vector.load %arg5[%c0_17, %c0_18] : memref<8x1xf32, #tpu.memory_space<vmem>>, vector<8x1xf32>
      tpu.vector_store %arg5[%c0_17, %c0_18], %38 {strides = array<i32>} : memref<8x1xf32, #tpu.memory_space<vmem>>, vector<8x1xf32>,
      %cst_19 = arith.constant 0.000000e+00 : f32
      %40 = vector.broadcast %cst_19 : f32 to vector<8x1xf32>
      %c0_20 = arith.constant 0 : index
      %c0_21 = arith.constant 0 : index
      %41 = vector.load %arg6[%c0_20, %c0_21] : memref<8x1xf32, #tpu.memory_space<vmem>>, vector<8x1xf32>
      tpu.vector_store %arg6[%c0_20, %c0_21], %40 {strides = array<i32>} : memref<8x1xf32, #tpu.memory_space<vmem>>, vector<8x1xf32>,
    } else {
    }
    %c0 = arith.constant 0 : index
    %c0_1 = arith.constant 0 : index
    %3 = vector.load %arg3[%c0, %c0_1] : memref<8x8xf32, #tpu.memory_space<vmem>>, vector<8x8xf32>
    %4 = vector.extract_strided_slice %3 {offsets = [0, 0], sizes = [8, 1], strides = [1, 1]} : vector<8x8xf32> to vector<8x1xf32>
    %5 = vector.extract_strided_slice %3 {offsets = [0, 2], sizes = [8, 1], strides = [1, 1]} : vector<8x8xf32> to vector<8x1xf32>
    %6 = arith.fptosi %5 : vector<8x1xf32> to vector<8x1xi32>
    %c0_2 = arith.constant 0 : index
    %c0_3 = arith.constant 0 : index
    %7 = vector.load %arg2[%c0_2, %c0_3] : memref<8x16xf32, #tpu.memory_space<vmem>>, vector<8x16xf32>
    %cst = arith.constant 6.400000e+01 : f32
    %8 = vector.broadcast %cst : f32 to vector<8x16xf32>
    %9 = arith.mulf %7, %8 : vector<8x16xf32>
    %c16_i32 = arith.constant 16 : i32
    %10 = arith.muli %arg1, %c16_i32 : i32
    %11 = tpu.iota {dimensions = array<i32: 1>} : vector<8x16xi32>
    %12 = vector.broadcast %10 : i32 to vector<8x16xi32>
    %13 = arith.addi %12, %11 : vector<8x16xi32>
    %14 = vector.broadcast %6 : vector<8x1xi32> to vector<8x16xi32>
    %15 = arith.cmpi eq, %13, %14 : vector<8x16xi32>
    %16 = vector.shape_cast %4 : vector<8x1xf32> to vector<8x1xf32>
    %17 = vector.broadcast %16 : vector<8x1xf32> to vector<8x16xf32>
    %18 = arith.select %15, %17, %9 : vector<8x16xi1>, vector<8x16xf32>
    %c0_4 = arith.constant 0 : index
    %c0_5 = arith.constant 0 : index
    %19 = vector.load %arg5[%c0_4, %c0_5] : memref<8x1xf32, #tpu.memory_space<vmem>>, vector<8x1xf32>
    %cst_6 = arith.constant dense<0xFF800000> : vector<8xf32>
    %20 = vector.multi_reduction <maximumf>, %18, %cst_6 [1] : vector<8x16xf32> to vector<8xf32>
    %21 = vector.shape_cast %20 : vector<8xf32> to vector<8x1xf32>
    %22 = arith.maximumf %19, %21 : vector<8x1xf32>
    %23 = arith.subf %19, %22 : vector<8x1xf32>
    %24 = math.exp %23 : vector<8x1xf32>
    %c0_7 = arith.constant 0 : index
    %c0_8 = arith.constant 0 : index
    %25 = vector.load %arg6[%c0_7, %c0_8] : memref<8x1xf32, #tpu.memory_space<vmem>>, vector<8x1xf32>
    %26 = arith.mulf %24, %25 : vector<8x1xf32>
    %27 = vector.broadcast %22 : vector<8x1xf32> to vector<8x16xf32>
    %28 = arith.subf %18, %27 : vector<8x16xf32>
    %29 = math.exp %28 : vector<8x16xf32>
    %cst_9 = arith.constant dense<0.000000e+00> : vector<8xf32>
    %30 = vector.multi_reduction <add>, %29, %cst_9 [1] : vector<8x16xf32> to vector<8xf32>
    %31 = vector.shape_cast %30 : vector<8xf32> to vector<8x1xf32>
    %32 = arith.addf %26, %31 : vector<8x1xf32>
    %c0_10 = arith.constant 0 : index
    %c0_11 = arith.constant 0 : index
    %33 = vector.load %arg6[%c0_10, %c0_11] : memref<8x1xf32, #tpu.memory_space<vmem>>, vector<8x1xf32>
    tpu.vector_store %arg6[%c0_10, %c0_11], %32 {strides = array<i32>} : memref<8x1xf32, #tpu.memory_space<vmem>>, vector<8x1xf32>,
    %c0_12 = arith.constant 0 : index
    %c0_13 = arith.constant 0 : index
    %34 = vector.load %arg5[%c0_12, %c0_13] : memref<8x1xf32, #tpu.memory_space<vmem>>, vector<8x1xf32>
    tpu.vector_store %arg5[%c0_12, %c0_13], %22 {strides = array<i32>} : memref<8x1xf32, #tpu.memory_space<vmem>>, vector<8x1xf32>,
    %c0_i32_14 = arith.constant 0 : i32
    %35 = arith.cmpi eq, %arg1, %c0_i32_14 : i32
    %36 = arith.extui %35 : i1 to i32
    %c0_i32_15 = arith.constant 0 : i32
    %37 = arith.cmpi ne, %36, %c0_i32_15 : i32
    scf.if %37 {
      %38 = vector.extract_strided_slice %3 {offsets = [0, 1], sizes = [8, 1], strides = [1, 1]} : vector<8x8xf32> to vector<8x1xf32>
      %c0_16 = arith.constant 0 : index
      %c0_17 = arith.constant 0 : index
      %39 = vector.load %arg5[%c0_16, %c0_17] : memref<8x1xf32, #tpu.memory_space<vmem>>, vector<8x1xf32>
      %40 = arith.subf %4, %39 : vector<8x1xf32>
      %c0_18 = arith.constant 0 : index
      %c0_19 = arith.constant 0 : index
      %41 = vector.load %arg6[%c0_18, %c0_19] : memref<8x1xf32, #tpu.memory_space<vmem>>, vector<8x1xf32>
      %42 = math.log %41 : vector<8x1xf32>
      %43 = arith.subf %40, %42 : vector<8x1xf32>
      %44 = arith.mulf %38, %43 : vector<8x1xf32>
      %45 = vector.shape_cast %44 : vector<8x1xf32> to vector<1x8x1xf32>
      %cst_20 = arith.constant dense<0.000000e+00> : vector<1xf32>
      %46 = vector.multi_reduction <add>, %45, %cst_20 [1, 2] : vector<1x8x1xf32> to vector<1xf32>
      %47 = vector.shape_cast %46 : vector<1xf32> to vector<1x1x1xf32>
      %48 = vector.extract %47[0, 0, 0] : f32 from vector<1x1x1xf32>
      %c0_21 = arith.constant 0 : index
      %c0_22 = arith.constant 0 : index
      %49 = memref.load %arg4[%c0_21, %c0_22] : memref<1x1xf32, #tpu.memory_space<smem>>
      memref.store %48, %arg4[%c0_21, %c0_22] : memref<1x1xf32, #tpu.memory_space<smem>>
    } else {
    }
    return
  }
  func.func @transform_0(%arg0: i32, %arg1: i32) -> (i32, i32) {
    %c0_i32 = arith.constant 0 : i32
    return %arg0, %arg1 : i32, i32
  }
  func.func @transform_1(%arg0: i32, %arg1: i32) -> (i32, i32) {
    %c0_i32 = arith.constant 0 : i32
    %c0_i32_0 = arith.constant 0 : i32
    return %arg0, %c0_i32 : i32, i32
  }
  func.func @transform_2(%arg0: i32, %arg1: i32) -> (i32, i32) {
    %c0_i32 = arith.constant 0 : i32
    %c0_i32_0 = arith.constant 0 : i32
    return %arg0, %c0_i32 : i32, i32
  }
}

</mosaic_0001>

<llo_original>
// kernel: tpu_custom_call.1
$region0: #{tpu_custom_call.1}
  #allocation0 [shape = 'u32[]', space=smem, size = 0x4, offset = 0x4, fixed_abs, tag = 'smem constant byte address 0x4 - core index']
  #allocation1 [shape = 'u32[144,128]{1,0:T(1,128)}', space=vmem, size = 0x12000, scoped, tag = 'internal scratch']
  #allocation2 [shape = 'f32[8,1]{1,0:T(8,128)}', space=vmem, size = 0x1000, scoped, tag = 'scratch operand']
  #allocation3 [shape = 'f32[8,1]{1,0:T(8,128)}', space=vmem, size = 0x1000, scoped, tag = 'scratch operand']
  %s0 = inlined_call_operand.hbm [shape: f32[8,16], index: 0, kind: input, shape index: {}]
  %s1 = inlined_call_operand.hbm [shape: f32[8,8], index: 1, kind: input, shape index: {}]
  %s2 = inlined_call_operand.hbm [shape: f32[1,1], index: 2, kind: output, shape index: {}]
  %s3 = sld [smem:[#allocation0]]
  $region34: #{tpu_custom_call.1} parent=0
    _
  %s5 = ssub.s32 1, %s3
  %s6 = scalar_select 0, %s5, %s3
  $region1: #{tpu_custom_call.1} parent=0
    #allocation4 [shape = 'u8[4096]{0}', space=vmem, size = 0x1000, scoped, tag = 'input window, operand 0, single buffered']
    #allocation5 [shape = 's32[1]{0}', space=sflag, size = 0x4, scoped, tag = 'scoped memory for tpu_custom_call.1']
    #allocation6 [shape = 's32[1]{0}', space=sflag, size = 0x4, scoped, tag = 'scoped memory for tpu_custom_call.1']
    #allocation7 [shape = 'u8[4096]{0}', space=vmem, size = 0x1000, scoped, tag = 'input window, operand 1, single buffered']
    #allocation8 [shape = 's32[1]{0}', space=sflag, size = 0x4, scoped, tag = 'scoped memory for tpu_custom_call.1']
    #allocation9 [shape = 'u8[512]{0}', space=smem, size = 0x200, scoped, tag = 'output window, operand 0, single buffered']
    %7 = vsyncpa [#allocation5], 0
    %8 = vsyncpa [#allocation8], 0
    %9 = vsyncpa [#allocation6], 0
    // Predicated region
    $region2: #{tpu_custom_call.1} parent=1 // pred_check
      _
    $region3: #{tpu_custom_call.1} parent=1 // pred_check_branch
      %11 = sbr.rel (0) target = $region5
    $region4: #{tpu_custom_call.1} parent=1 // pred_region
      %s13 = ssub.s32 128, 128
      %14 = vsyncadd [#allocation5], %s13
      %s16 = sshll.u32 [#allocation4], 4
      %s17 = int_to_ptr.vmem [resolvable:$true] %s16
      %19 = dma.hbm_to_vmem [thread:$0]  %s0, 128, %s17, [#allocation5]
    $region5: #{tpu_custom_call.1} parent=1 // pred_fallthru
      _
    // Predicated region
    $region6: #{tpu_custom_call.1} parent=1 // pred_check
      _
    $region7: #{tpu_custom_call.1} parent=1 // pred_check_branch
      %21 = sbr.rel (0) target = $region9
    $region8: #{tpu_custom_call.1} parent=1 // pred_region
      %s23 = ssub.s32 128, 128
      %24 = vsyncadd [#allocation8], %s23
      %s26 = sshll.u32 [#allocation7], 4
      %s27 = int_to_ptr.vmem [resolvable:$true] %s26
      %29 = dma.hbm_to_vmem [thread:$0]  %s1, 128, %s27, [#allocation8]
    $region9: #{tpu_custom_call.1} parent=1 // pred_fallthru
      _
    // Predicated region
    $region10: #{tpu_custom_call.1} parent=1 // pred_check
      _
    $region11: #{tpu_custom_call.1} parent=1 // pred_check_branch
      %31 = sbr.rel (0) target = $region13
    $region12: #{tpu_custom_call.1} parent=1 // pred_region
      %32 = dma.done [#allocation5], 128
    $region13: #{tpu_custom_call.1} parent=1 // pred_fallthru
      _
    // Predicated region
    $region14: #{tpu_custom_call.1} parent=1 // pred_check
      _
    $region15: #{tpu_custom_call.1} parent=1 // pred_check_branch
      %34 = sbr.rel (0) target = $region17
    $region16: #{tpu_custom_call.1} parent=1 // pred_region
      %35 = dma.done [#allocation8], 128
    $region17: #{tpu_custom_call.1} parent=1 // pred_fallthru
      _
    %p36 = scmp.eq.s32.totalorder 0, 0
    // Predicated region
    $region18: #{tpu_custom_call.1} parent=1 // pred_check
      %p37 = pneg %p36
    $region19: #{tpu_custom_call.1} parent=1 // pred_check_branch
      %39 = sbr.rel (%p37) target = $region21
    $region20: #{tpu_custom_call.1} parent=1 // pred_region
      %vm40 = vcmask 7168
      %41 = vst.msk [vmem:[#allocation2] sm:$0xff] %vm40, -1e+09
      %42 = vst.msk [vmem:[#allocation3] sm:$0xff] %vm40, 0.0
    $region21: #{tpu_custom_call.1} parent=1 // pred_fallthru
      _
    %v43 = vld [vmem:[#allocation7] sm:$0xff]
    %v44 = vcvt.f32.s32.to.zero.pseudo %v43
    %v45 = vld [vmem:[#allocation4] sm:$0xff]
    %v46 = vmul.f32 %v45, 64.0
    %s47 = smul.u32 0, 16
    %v48 = vlaneseq
    %v49 = vand.u32 %v48, 127
    %v50 = vstv %s47
    %v51 = vadd.s32 %v50, %v49
    %52 = vset.pattern.permute.xlu0 2
    %53 = vperm.xlu0 %52, %v44
    %v54 = vpop.permute.xlu0 %53
    %vm55 = vcmp.eq.s32.totalorder %v51, %v54
    %57 = vset.pattern.permute.xlu0 0
    %58 = vperm.xlu0 %57, %v43
    %v59 = vpop.permute.xlu0 %58
    %v61 = vsel %vm55, %v59, %v46
    %v62 = vld [vmem:[#allocation2] sm:$0xff]
    %vm63 = vcmask 130048
    %v64 = vsel %vm63, %v61, -inf
    %65 = vmax.xlane.f32.xlu0 %v64
    %v66 = vpop.xlane.xlu0 %65
    %v67 = vmax.f32 %v62, %v66
    %v68 = vsub.f32 %v62, %v67
    %v69 = vmul.f32 %v68, 1.442695
    %v70 = vpow.pop %v69
    %v71 = vld [vmem:[#allocation3] sm:$0xff]
    %v72 = vmul.f32 %v70, %v71
    %74 = vset.pattern.permute.xlu0 0
    %75 = vperm.xlu0 %74, %v67
    %v76 = vpop.permute.xlu0 %75
    %v78 = vsub.f32 %v61, %v76
    %v79 = vmul.f32 %v78, 1.442695
    %v80 = vpow.pop %v79
    %v81 = vsel %vm63, %v80, 0.0
    %82 = vadd.xlane.f32.xlu0 %v81
    %v83 = vpop.xlane.xlu0 %82
    %v84 = vadd.f32 %v72, %v83
    %vm85 = vcmask 7168
    %86 = vst.msk [vmem:[#allocation3] sm:$0xff] %vm85, %v84
    %87 = vst.msk [vmem:[#allocation2] sm:$0xff] %vm85, %v67
    // Predicated region
    $region22: #{tpu_custom_call.1} parent=1 // pred_check
      %p88 = pneg %p36
    $region23: #{tpu_custom_call.1} parent=1 // pred_check_branch
      %90 = sbr.rel (%p88) target = $region25
    $region24: #{tpu_custom_call.1} parent=1 // pred_region
      %v91 = vld [vmem:[#allocation2] sm:$0xff]
      %v92 = vsub.f32 %v43, %v91
      %v93 = vld [vmem:[#allocation3] sm:$0xff]
      %v94 = vlog2.pop %v93
      %v95 = vmul.f32 %v94, 0.6931472
      %v96 = vsub.f32 %v92, %v95
      %98 = vrot.lane.b32.xlu0 %v96, 1
      %v99 = vpop.permute.xlu0 %98
      %v101 = vmul.f32 %v43, %v99
      %103 = vrot.lane.b32.xlu0 %v101, 127
      %v104 = vpop.permute.xlu0 %103
      %v106 = vsel %vm85, %v104, 0.0
      %107 = vadd.xlane.f32.xlu0 %v106
      %v108 = vpop.xlane.xlu0 %107
      %v109 = vrot.slane %v108, 4
      %v110 = vadd.f32 %v108, %v109
      %v111 = vrot.slane %v110, 2
      %v112 = vadd.f32 %v110, %v111
      %v113 = vrot.slane %v112, 1
      %v114 = vadd.f32 %v112, %v113
      %s115 = vtos %v114
      %s116 = scalar_lea.smem [#allocation9], 0
      %117 = sst [smem:[%s116]] %s115
    $region25: #{tpu_custom_call.1} parent=1 // pred_fallthru
      _
    // Predicated region
    $region26: #{tpu_custom_call.1} parent=1 // pred_check
      _
    $region27: #{tpu_custom_call.1} parent=1 // pred_check_branch
      %119 = sbr.rel (0) target = $region29
    $region28: #{tpu_custom_call.1} parent=1 // pred_region
      %s121 = ssub.s32 16, 16
      %122 = vsyncadd [#allocation6], %s121
      %125 = dma.smem_to_hbm [#allocation9], 16, %s2, [#allocation6]
    $region29: #{tpu_custom_call.1} parent=1 // pred_fallthru
      _
    // Predicated region
    $region30: #{tpu_custom_call.1} parent=1 // pred_check
      _
    $region31: #{tpu_custom_call.1} parent=1 // pred_check_branch
      %127 = sbr.rel (0) target = $region33
    $region32: #{tpu_custom_call.1} parent=1 // pred_region
      %128 = dma.done [#allocation6], 16
    $region33: #{tpu_custom_call.1} parent=1 // pred_fallthru
      _
    %129 = sfence
    %130 = vsyncpa [#allocation5], 1
    %131 = vsyncpa [#allocation8], 1
    %132 = vsyncpa [#allocation6], 1

</llo_original>
